<compile_context>
chip_gen: v5e
topology: v5e:2x2
jax: 0.10.0
libtpu: 0.0.40
codegen_flags: <defaults>
</compile_context>

<pallas_src>
import functools

import jax
import jax.numpy as jnp
from jax import lax
from jax.experimental import pallas as pl
from jax.experimental.pallas import tpu as pltpu


# ---------------------------------------------------------------------------
# In-kernel depthwise 3x3 conv on a lane-flattened (rows, W*C) tile.
# ---------------------------------------------------------------------------
def _dwconv_lane_flat(x2d, w_ref, *, c, img_h):
    """Depthwise 3x3 cross-correlation (stride 1, zero pad 1).

    x2d:   (rows, W*C) f32, rows = Bt*img_h (Bt images stacked along sublanes).
    w_ref: (3, 3, W*C) ref; width-halo taps pre-zeroed in the wrapper
           (w[:,0,:C] == 0 and w[:,2,-C:] == 0), so lane-roll wraparound is
           annihilated by the weights -> no in-kernel lane masks needed.
    c:     channel count == lane shift of one pixel step in W.
    img_h: image height; used for the per-image row-halo masks.
    """
    rows, wc = x2d.shape

    # Hoist the 9 taps once per tile (each (1, W*C), broadcast over sublanes).
    taps = [[w_ref[ky, kx:kx + 1].astype(jnp.float32) for kx in range(3)]
            for ky in range(3)]
    (w00, w01, w02), (w10, w11, w12), (w20, w21, w22) = [tuple(r) for r in taps]

    # Width (kx) shifts: lane rolls by +-C (XLU slot).  pltpu.roll requires a
    # non-negative shift, so the "-C" roll is written as (wc - c) % wc.
    x_left = pltpu.roll(x2d, shift=c, axis=1)                # x[.., w-1] (wrap killed by zero taps)
    x_right = pltpu.roll(x2d, shift=(wc - c) % wc, axis=1)   # x[.., w+1]

    # Per-image row-halo masks (same every grid step): block row r -> image row r % img_h.
    row = lax.broadcasted_iota(jnp.int32, (rows, 1), 0)
    rmod = row % img_h
    mask_up = (rmod >= 1).astype(jnp.float32)
    mask_dn = (rmod < img_h - 1).astype(jnp.float32)

    # ky = 1: same input row.
    acc = x_left * w10 + x2d * w11 + x_right * w12
    # ky = 0: input row h-1 -> sublane roll down by 1, masked at image row 0.
    s_up = x_left * w00 + x2d * w01 + x_right * w02
    acc = acc + mask_up * pltpu.roll(s_up, shift=1, axis=0)
    # ky = 2: input row h+1 -> sublane roll up by 1 == roll by rows-1.
    s_dn = x_left * w20 + x2d * w21 + x_right * w22
    acc = acc + mask_dn * pltpu.roll(s_dn, shift=(rows - 1) % rows, axis=0)
    # TODO(synk): if bundle dumps show vreg spills binding at large Bt, process the tile
    # in fixed 8-row chunks with lax.fori_loop(..., unroll=True).
    return acc


# ---------------------------------------------------------------------------
# Kernels.
# ---------------------------------------------------------------------------
def _stats_kernel(x_ref, w_ref, sum_ref, sq_ref, *, c, img_h):
    """Pass 1 (recompute strategy): per-block partial sum / sum-of-squares of conv output."""
    y = _dwconv_lane_flat(x_ref[...].astype(jnp.float32), w_ref, c=c, img_h=img_h)
    sum_ref[0] = jnp.sum(y, axis=0, keepdims=True)
    sq_ref[0] = jnp.sum(y * y, axis=0, keepdims=True)


def _stats_spill_kernel(x_ref, w_ref, y_ref, sum_ref, sq_ref, *, c, img_h):
    """Pass 1 (spill strategy, v7x): also write the conv output y (f32) to HBM."""
    y = _dwconv_lane_flat(x_ref[...].astype(jnp.float32), w_ref, c=c, img_h=img_h)
    y_ref[...] = y
    sum_ref[0] = jnp.sum(y, axis=0, keepdims=True)
    sq_ref[0] = jnp.sum(y * y, axis=0, keepdims=True)


def _conv_bn_relu_kernel(x_ref, w_ref, scale_ref, shift_ref, o_ref, *, c, img_h):
    """Pass 2 (recompute strategy): recompute conv, fuse BN affine + ReLU, lane-dense store."""
    y = _dwconv_lane_flat(x_ref[...].astype(jnp.float32), w_ref, c=c, img_h=img_h)
    y = y * scale_ref[...] + shift_ref[...]
    o_ref[...] = jnp.maximum(y, 0.0).astype(o_ref.dtype)


def _bn_relu_kernel(y_ref, scale_ref, shift_ref, o_ref):
    """Pass 2 (spill strategy): pure affine + ReLU over the stored conv output."""
    y = y_ref[...] * scale_ref[...] + shift_ref[...]
    o_ref[...] = jnp.maximum(y, 0.0).astype(o_ref.dtype)


# ---------------------------------------------------------------------------
# Wrapper.
# ---------------------------------------------------------------------------
def _pick_batch_tile(b, h, per_image_bytes, target_bytes=4 << 20, min_grid=4):
    """Largest per-step image count whose block fits `target_bytes`, preferring
    choices that leave >= min_grid grid steps for pipelining / megacore."""
    candidates = [d for d in range(1, b + 1)
                  if b % d == 0 and ((d * h) % 8 == 0 or d == b)]
    fits = [d for d in candidates if d * per_image_bytes <= target_bytes] or [min(candidates)]
    deep = [d for d in fits if b // d >= min_grid]
    return max(deep) if deep else max(fits)


def _prefer_spill_y():
    """On v7x HBM is ~3.2 TB/s while VPU width is unchanged -> spilling the conv output
    beats recomputing it.  On v5e/v6e (mem-bound) keep the recompute strategy."""
    try:
        kind = jax.devices()[0].device_kind.lower()
    except Exception:
        return False
    return ("v7" in kind) or ("tpu7" in kind) or ("7x" in kind)


def dw_bn_relu(x, H, W, w, b, gamma, beta, eps=1e-5, spill_y=None):
    """x: (B, N, C) with N == H*W.  Returns (B, N, C), matching DW_bn_relu.forward
    (training-mode BatchNorm2d, i.e. batch statistics)."""
    B, N, C = x.shape
    assert N == H * W, "N must equal H*W"
    WC = W * C
    rows_total = B * H

    if spill_y is None:
        spill_y = _prefer_spill_y()

    # (B, N, C) == (B, H, W, C) row-major == (B*H, W*C): free metadata reshape,
    # channels packed into the lane axis (lane-dense whenever W*C >= 128).
    x2 = x.reshape(rows_total, WC)

    # Depthwise taps tiled along W; the width-halo masks are folded into the weights:
    # the kx=0 tap is invalid at output column 0, the kx=2 tap at column W-1.
    w4 = jnp.broadcast_to(w.reshape(3, 3, 1, C).astype(jnp.float32), (3, 3, W, C))
    col = jnp.arange(W)
    kx_valid = jnp.stack([col > 0, jnp.ones((W,), bool), col < W - 1], axis=0)   # (3, W)
    w_flat = (w4 * kx_valid[None, :, :, None].astype(jnp.float32)).reshape(3, 3, WC)

    # Conv bias `b` cancels exactly against the train-mode BN mean subtraction.
    del b

    # Batch-blocked grid: Bt images per step.
    per_image_bytes = H * WC * max(x.dtype.itemsize, 4)
    Bt = _pick_batch_tile(B, H, per_image_bytes)
    G = B // Bt
    rows_blk = Bt * H

    cparams = pltpu.CompilerParams(
        dimension_semantics=("parallel",),          # shard the batch grid across TCs (v7x)
        vmem_limit_bytes=48 * 1024 * 1024,          # safe on v7x's 64 MiB; raise on v5e/v6e if needed
    )

    x_spec = pl.BlockSpec((rows_blk, WC), lambda i: (i, 0))
    w_spec = pl.BlockSpec((3, 3, WC), lambda i: (0, 0, 0))
    vec_spec = pl.BlockSpec((1, WC), lambda i: (0, 0))
    part_spec = pl.BlockSpec((1, 1, WC), lambda i: (i, 0, 0))
    part_shape = jax.ShapeDtypeStruct((G, 1, WC), jnp.float32)

    # ---- Pass 1: conv-output statistics (optionally also spill y on v7x) --------------
    if spill_y:
        y_full, sum_p, sq_p = pl.pallas_call(
            functools.partial(_stats_spill_kernel, c=C, img_h=H),
            out_shape=(jax.ShapeDtypeStruct((rows_total, WC), jnp.float32),
                       part_shape, part_shape),
            grid_spec=pltpu.PrefetchScalarGridSpec(
                num_scalar_prefetch=0, grid=(G,),
                in_specs=[x_spec, w_spec],
                out_specs=(x_spec, part_spec, part_spec)),
            compiler_params=cparams,
        )(x2, w_flat)
    else:
        sum_p, sq_p = pl.pallas_call(
            functools.partial(_stats_kernel, c=C, img_h=H),
            out_shape=(part_shape, part_shape),
            grid_spec=pltpu.PrefetchScalarGridSpec(
                num_scalar_prefetch=0, grid=(G,),
                in_specs=[x_spec, w_spec],
                out_specs=(part_spec, part_spec)),
            compiler_params=cparams,
        )(x2, w_flat)

    # Finish the BN batch statistics on (C,)-sized data in plain JAX (tiny).
    n = float(B * H * W)
    ch_sum = sum_p.reshape(G, W, C).sum(axis=(0, 1))
    ch_sq = sq_p.reshape(G, W, C).sum(axis=(0, 1))
    mean = ch_sum / n
    var = ch_sq / n - mean * mean          # f32 accumulation; fine for conv-scale activations
    rstd = lax.rsqrt(var + eps)
    scale_c = gamma.astype(jnp.float32) * rstd
    shift_c = beta.astype(jnp.float32) - mean * scale_c
    scale = jnp.broadcast_to(scale_c, (W, C)).reshape(1, WC)
    shift = jnp.broadcast_to(shift_c, (W, C)).reshape(1, WC)

    # ---- Pass 2: BN affine + ReLU (conv recomputed or read back per chip) -------------
    if spill_y:
        out2 = pl.pallas_call(
            _bn_relu_kernel,
            out_shape=jax.ShapeDtypeStruct((rows_total, WC), x.dtype),
            grid_spec=pltpu.PrefetchScalarGridSpec(
                num_scalar_prefetch=0, grid=(G,),
                in_specs=[x_spec, vec_spec, vec_spec],
                out_specs=x_spec),
            compiler_params=cparams,
        )(y_full, scale, shift)
    else:
        out2 = pl.pallas_call(
            functools.partial(_conv_bn_relu_kernel, c=C, img_h=H),
            out_shape=jax.ShapeDtypeStruct((rows_total, WC), x.dtype),
            grid_spec=pltpu.PrefetchScalarGridSpec(
                num_scalar_prefetch=0, grid=(G,),
                in_specs=[x_spec, w_spec, vec_spec, vec_spec],
                out_specs=x_spec),
            compiler_params=cparams,
        )(x2, w_flat, scale, shift)

    # TODO(synk): for images whose (Bt*H, W*C) block exceeds VMEM even at Bt=1, add an
    # H-tile grid axis with a manual halo DMA (memory_space=pl.ANY + pltpu.make_async_copy).
    return out2.reshape(B, N, C)


# ---------------------------------------------------------------------------
# Pure-JAX reference mirroring the PyTorch forward (training-mode BN, with bias).
# ---------------------------------------------------------------------------
def dw_bn_relu_reference(x, H, W, w, b, gamma, beta, eps=1e-5):
    B, N, C = x.shape
    xi = x.reshape(B, H, W, C)
    rhs = w.reshape(3, 3, 1, C)                                 # HWIO, depthwise
    y = lax.conv_general_dilated(
        xi, rhs, window_strides=(1, 1), padding="SAME",
        dimension_numbers=("NHWC", "HWIO", "NHWC"),
        feature_group_count=C) + b
    mean = y.mean(axis=(0, 1, 2), keepdims=True)
    var = ((y - mean) ** 2).mean(axis=(0, 1, 2), keepdims=True)
    y = (y - mean) / jnp.sqrt(var + eps) * gamma + beta
    return jnp.maximum(y, 0.0).reshape(B, N, C)


if __name__ == "__main__":
    # Small shapes consistent with the module: C channels, tokens N = H*W.
    # W*C = 512 keeps the lane axis dense (multiple of 128); H multiple of 8.
    B, C, H, W = 2, 32, 16, 16
    N = H * W

    key = jax.random.PRNGKey(0)
    kx, kw, kb, kg, kbe = jax.random.split(key, 5)

    x = jax.random.normal(kx, (B, N, C), dtype=jnp.float32)
    # Conv2d(dim, dim, 3, groups=dim) weight (dim,1,3,3) stored here as (3,3,C):
    # w[ky,kx,c] == torch_weight[c,0,ky,kx].
    w = jax.random.normal(kw, (3, 3, C), dtype=jnp.float32) * 0.1
    b = jax.random.normal(kb, (C,), dtype=jnp.float32) * 0.1
    gamma = 1.0 + 0.1 * jax.random.normal(kg, (C,), dtype=jnp.float32)
    beta = 0.1 * jax.random.normal(kbe, (C,), dtype=jnp.float32)

    ref = dw_bn_relu_reference(x, H, W, w, b, gamma, beta)

    # Validate the auto-selected strategy plus both explicit strategies
    # (recompute: v5e/v6e default; spill-y: v7x default).
    for spill in (None, False, True):
        out = jax.block_until_ready(dw_bn_relu(x, H, W, w, b, gamma, beta, spill_y=spill))
        assert out.shape == (B, N, C)
        assert jnp.allclose(out, ref, atol=1e-4, rtol=1e-4), (
            f"mismatch vs reference (spill_y={spill}), "
            f"max abs err {float(jnp.max(jnp.abs(out - ref)))}")
    print("KERNEL_OK")
</pallas_src>

<mosaic_0001>
module attributes {stable_mosaic.version = 11 : i64} {
  func.func @_stats_kernel(%arg0: i32, %arg1: memref<32x512xf32, #tpu.memory_space<vmem>>, %arg2: memref<3x3x512xf32, #tpu.memory_space<vmem>>, %arg3: memref<1x1x512xf32, #tpu.memory_space<vmem>>, %arg4: memref<1x1x512xf32, #tpu.memory_space<vmem>>) attributes {dimension_semantics = [#tpu.dimension_semantics<parallel>], iteration_bounds = array<i64: 1>, scalar_prefetch = 0 : i64, scratch_operands = 0 : i64, tpu.core_type = #tpu.core_type<tc>, window_params = [{transform_indices = @transform_0, window_bounds = array<i64: 32, 512>}, {pipeline_mode = #tpu.pipeline_mode<synchronous>, transform_indices = @transform_1, window_bounds = array<i64: 3, 3, 512>}, {transform_indices = @transform_2, window_bounds = array<i64: 1, 1, 512>}, {transform_indices = @transform_3, window_bounds = array<i64: 1, 1, 512>}]} {
    %c0 = arith.constant 0 : index
    %c0_0 = arith.constant 0 : index
    %0 = vector.load %arg1[%c0, %c0_0] : memref<32x512xf32, #tpu.memory_space<vmem>>, vector<32x512xf32>
    %c0_1 = arith.constant 0 : index
    %c0_2 = arith.constant 0 : index
    %c0_3 = arith.constant 0 : index
    %1 = vector.load %arg2[%c0_1, %c0_2, %c0_3] : memref<3x3x512xf32, #tpu.memory_space<vmem>>, vector<1x1x512xf32>
    %2 = vector.shape_cast %1 : vector<1x1x512xf32> to vector<1x512xf32>
    %c0_4 = arith.constant 0 : index
    %c1 = arith.constant 1 : index
    %c0_5 = arith.constant 0 : index
    %3 = vector.load %arg2[%c0_4, %c1, %c0_5] : memref<3x3x512xf32, #tpu.memory_space<vmem>>, vector<1x1x512xf32>
    %4 = vector.shape_cast %3 : vector<1x1x512xf32> to vector<1x512xf32>
    %c0_6 = arith.constant 0 : index
    %c2 = arith.constant 2 : index
    %c0_7 = arith.constant 0 : index
    %5 = vector.load %arg2[%c0_6, %c2, %c0_7] : memref<3x3x512xf32, #tpu.memory_space<vmem>>, vector<1x1x512xf32>
    %6 = vector.shape_cast %5 : vector<1x1x512xf32> to vector<1x512xf32>
    %c1_8 = arith.constant 1 : index
    %c0_9 = arith.constant 0 : index
    %c0_10 = arith.constant 0 : index
    %7 = vector.load %arg2[%c1_8, %c0_9, %c0_10] : memref<3x3x512xf32, #tpu.memory_space<vmem>>, vector<1x1x512xf32>
    %8 = vector.shape_cast %7 : vector<1x1x512xf32> to vector<1x512xf32>
    %c1_11 = arith.constant 1 : index
    %c1_12 = arith.constant 1 : index
    %c0_13 = arith.constant 0 : index
    %9 = vector.load %arg2[%c1_11, %c1_12, %c0_13] : memref<3x3x512xf32, #tpu.memory_space<vmem>>, vector<1x1x512xf32>
    %10 = vector.shape_cast %9 : vector<1x1x512xf32> to vector<1x512xf32>
    %c1_14 = arith.constant 1 : index
    %c2_15 = arith.constant 2 : index
    %c0_16 = arith.constant 0 : index
    %11 = vector.load %arg2[%c1_14, %c2_15, %c0_16] : memref<3x3x512xf32, #tpu.memory_space<vmem>>, vector<1x1x512xf32>
    %12 = vector.shape_cast %11 : vector<1x1x512xf32> to vector<1x512xf32>
    %c2_17 = arith.constant 2 : index
    %c0_18 = arith.constant 0 : index
    %c0_19 = arith.constant 0 : index
    %13 = vector.load %arg2[%c2_17, %c0_18, %c0_19] : memref<3x3x512xf32, #tpu.memory_space<vmem>>, vector<1x1x512xf32>
    %14 = vector.shape_cast %13 : vector<1x1x512xf32> to vector<1x512xf32>
    %c2_20 = arith.constant 2 : index
    %c1_21 = arith.constant 1 : index
    %c0_22 = arith.constant 0 : index
    %15 = vector.load %arg2[%c2_20, %c1_21, %c0_22] : memref<3x3x512xf32, #tpu.memory_space<vmem>>, vector<1x1x512xf32>
    %16 = vector.shape_cast %15 : vector<1x1x512xf32> to vector<1x512xf32>
    %c2_23 = arith.constant 2 : index
    %c2_24 = arith.constant 2 : index
    %c0_25 = arith.constant 0 : index
    %17 = vector.load %arg2[%c2_23, %c2_24, %c0_25] : memref<3x3x512xf32, #tpu.memory_space<vmem>>, vector<1x1x512xf32>
    %18 = vector.shape_cast %17 : vector<1x1x512xf32> to vector<1x512xf32>
    %c32_i32 = arith.constant 32 : i32
    %19 = tpu.dynamic_rotate %0 by %c32_i32 dim 1 : vector<32x512xf32>, i32 -> vector<32x512xf32>
    %c480_i32 = arith.constant 480 : i32
    %20 = tpu.dynamic_rotate %0 by %c480_i32 dim 1 : vector<32x512xf32>, i32 -> vector<32x512xf32>
    %21 = tpu.iota {dimensions = array<i32: 0>} : vector<32x1xi32>
    %c16_i32 = arith.constant 16 : i32
    %c0_i32 = arith.constant 0 : i32
    %22 = arith.cmpi eq, %c16_i32, %c0_i32 : i32
    %c1_i32 = arith.constant 1 : i32
    %23 = arith.select %22, %c1_i32, %c16_i32 : i32
    %24 = vector.broadcast %23 : i32 to vector<32x1xi32>
    %25 = arith.remsi %21, %24 : vector<32x1xi32>
    %c0_i32_26 = arith.constant 0 : i32
    %26 = vector.broadcast %c0_i32_26 : i32 to vector<32x1xi32>
    %27 = arith.cmpi ne, %25, %26 : vector<32x1xi32>
    %c0_i32_27 = arith.constant 0 : i32
    %28 = vector.broadcast %c0_i32_27 : i32 to vector<32x1xi32>
    %29 = arith.cmpi slt, %25, %28 : vector<32x1xi32>
    %c0_i32_28 = arith.constant 0 : i32
    %30 = arith.cmpi slt, %23, %c0_i32_28 : i32
    %31 = vector.broadcast %30 : i1 to vector<32x1xi1>
    %32 = vector.broadcast %31 : vector<32x1xi1> to vector<32x1xi1>
    %33 = arith.xori %29, %32 : vector<32x1xi1>
    %34 = arith.andi %33, %27 : vector<32x1xi1>
    %35 = vector.broadcast %23 : i32 to vector<32x1xi32>
    %36 = arith.addi %25, %35 : vector<32x1xi32>
    %37 = arith.select %34, %36, %25 : vector<32x1xi1>, vector<32x1xi32>
    %c1_i32_29 = arith.constant 1 : i32
    %38 = vector.broadcast %c1_i32_29 : i32 to vector<32x1xi32>
    %39 = arith.cmpi sge, %37, %38 : vector<32x1xi32>
    %40 = arith.extui %39 : vector<32x1xi1> to vector<32x1xi32>
    %41 = arith.sitofp %40 : vector<32x1xi32> to vector<32x1xf32>
    %c15_i32 = arith.constant 15 : i32
    %42 = vector.broadcast %c15_i32 : i32 to vector<32x1xi32>
    %43 = arith.cmpi slt, %37, %42 : vector<32x1xi32>
    %44 = arith.extui %43 : vector<32x1xi1> to vector<32x1xi32>
    %45 = arith.sitofp %44 : vector<32x1xi32> to vector<32x1xf32>
    %46 = vector.broadcast %8 : vector<1x512xf32> to vector<32x512xf32>
    %47 = arith.mulf %19, %46 : vector<32x512xf32>
    %48 = vector.broadcast %10 : vector<1x512xf32> to vector<32x512xf32>
    %49 = arith.mulf %0, %48 : vector<32x512xf32>
    %50 = arith.addf %47, %49 : vector<32x512xf32>
    %51 = vector.broadcast %12 : vector<1x512xf32> to vector<32x512xf32>
    %52 = arith.mulf %20, %51 : vector<32x512xf32>
    %53 = arith.addf %50, %52 : vector<32x512xf32>
    %54 = vector.broadcast %2 : vector<1x512xf32> to vector<32x512xf32>
    %55 = arith.mulf %19, %54 : vector<32x512xf32>
    %56 = vector.broadcast %4 : vector<1x512xf32> to vector<32x512xf32>
    %57 = arith.mulf %0, %56 : vector<32x512xf32>
    %58 = arith.addf %55, %57 : vector<32x512xf32>
    %59 = vector.broadcast %6 : vector<1x512xf32> to vector<32x512xf32>
    %60 = arith.mulf %20, %59 : vector<32x512xf32>
    %61 = arith.addf %58, %60 : vector<32x512xf32>
    %c1_i32_30 = arith.constant 1 : i32
    %62 = tpu.dynamic_rotate %61 by %c1_i32_30 dim 0 : vector<32x512xf32>, i32 -> vector<32x512xf32>
    %63 = vector.broadcast %41 : vector<32x1xf32> to vector<32x512xf32>
    %64 = arith.mulf %63, %62 : vector<32x512xf32>
    %65 = arith.addf %53, %64 : vector<32x512xf32>
    %66 = vector.broadcast %14 : vector<1x512xf32> to vector<32x512xf32>
    %67 = arith.mulf %19, %66 : vector<32x512xf32>
    %68 = vector.broadcast %16 : vector<1x512xf32> to vector<32x512xf32>
    %69 = arith.mulf %0, %68 : vector<32x512xf32>
    %70 = arith.addf %67, %69 : vector<32x512xf32>
    %71 = vector.broadcast %18 : vector<1x512xf32> to vector<32x512xf32>
    %72 = arith.mulf %20, %71 : vector<32x512xf32>
    %73 = arith.addf %70, %72 : vector<32x512xf32>
    %c31_i32 = arith.constant 31 : i32
    %74 = tpu.dynamic_rotate %73 by %c31_i32 dim 0 : vector<32x512xf32>, i32 -> vector<32x512xf32>
    %75 = vector.broadcast %45 : vector<32x1xf32> to vector<32x512xf32>
    %76 = arith.mulf %75, %74 : vector<32x512xf32>
    %77 = arith.addf %65, %76 : vector<32x512xf32>
    %cst = arith.constant dense<0.000000e+00> : vector<512xf32>
    %78 = vector.multi_reduction <add>, %77, %cst [0] : vector<32x512xf32> to vector<512xf32>
    %79 = vector.shape_cast %78 : vector<512xf32> to vector<1x512xf32>
    %c0_31 = arith.constant 0 : index
    %c0_32 = arith.constant 0 : index
    %c0_33 = arith.constant 0 : index
    %80 = vector.load %arg3[%c0_31, %c0_32, %c0_33] : memref<1x1x512xf32, #tpu.memory_space<vmem>>, vector<1x1x512xf32>
    %81 = vector.shape_cast %80 : vector<1x1x512xf32> to vector<1x512xf32>
    %82 = vector.shape_cast %79 : vector<1x512xf32> to vector<1x1x512xf32>
    tpu.vector_store %arg3[%c0_31, %c0_32, %c0_33], %82 {strides = array<i32>} : memref<1x1x512xf32, #tpu.memory_space<vmem>>, vector<1x1x512xf32>,
    %83 = arith.mulf %77, %77 : vector<32x512xf32>
    %cst_34 = arith.constant dense<0.000000e+00> : vector<512xf32>
    %84 = vector.multi_reduction <add>, %83, %cst_34 [0] : vector<32x512xf32> to vector<512xf32>
    %85 = vector.shape_cast %84 : vector<512xf32> to vector<1x512xf32>
    %c0_35 = arith.constant 0 : index
    %c0_36 = arith.constant 0 : index
    %c0_37 = arith.constant 0 : index
    %86 = vector.load %arg4[%c0_35, %c0_36, %c0_37] : memref<1x1x512xf32, #tpu.memory_space<vmem>>, vector<1x1x512xf32>
    %87 = vector.shape_cast %86 : vector<1x1x512xf32> to vector<1x512xf32>
    %88 = vector.shape_cast %85 : vector<1x512xf32> to vector<1x1x512xf32>
    tpu.vector_store %arg4[%c0_35, %c0_36, %c0_37], %88 {strides = array<i32>} : memref<1x1x512xf32, #tpu.memory_space<vmem>>, vector<1x1x512xf32>,
    return
  }
  func.func @transform_0(%arg0: i32) -> (i32, i32) {
    %c0_i32 = arith.constant 0 : i32
    %c0_i32_0 = arith.constant 0 : i32
    return %arg0, %c0_i32 : i32, i32
  }
  func.func @transform_1(%arg0: i32) -> (i32, i32, i32) {
    %c0_i32 = arith.constant 0 : i32
    %c0_i32_0 = arith.constant 0 : i32
    %c0_i32_1 = arith.constant 0 : i32
    %c0_i32_2 = arith.constant 0 : i32
    return %c0_i32, %c0_i32_0, %c0_i32_1 : i32, i32, i32
  }
  func.func @transform_2(%arg0: i32) -> (i32, i32, i32) {
    %c0_i32 = arith.constant 0 : i32
    %c0_i32_0 = arith.constant 0 : i32
    %c0_i32_1 = arith.constant 0 : i32
    return %arg0, %c0_i32, %c0_i32_0 : i32, i32, i32
  }
  func.func @transform_3(%arg0: i32) -> (i32, i32, i32) {
    %c0_i32 = arith.constant 0 : i32
    %c0_i32_0 = arith.constant 0 : i32
    %c0_i32_1 = arith.constant 0 : i32
    return %arg0, %c0_i32, %c0_i32_0 : i32, i32, i32
  }
}

</mosaic_0001>

<llo_original>
// kernel: tpu_custom_call.1
$region0: #{tpu_custom_call.1}
  #allocation0 [shape = 'u32[]', space=smem, size = 0x4, offset = 0x4, fixed_abs, tag = 'smem constant byte address 0x4 - core index']
  #allocation1 [shape = 'u32[72,128]{1,0:T(1,128)}', space=vmem, size = 0x9000, scoped, tag = 'internal scratch']
  %s0 = inlined_call_operand.hbm [shape: f32[32,512], index: 0, kind: input, shape index: {}]
  %s1 = inlined_call_operand.hbm [shape: f32[3,3,512], index: 1, kind: input, shape index: {}]
  %s2 = inlined_call_operand.hbm [shape: f32[1,1,512], index: 2, kind: output, shape index: {0}]
  %s3 = inlined_call_operand.hbm [shape: f32[1,1,512], index: 3, kind: output, shape index: {1}]
  %4 = xla_tuple %s2, %s3
  %s5 = sld [smem:[#allocation0]]
  $region34: #{tpu_custom_call.1} parent=0
    _
  %s7 = ssub.s32 1, %s5
  %s8 = scalar_select 0, %s7, %s5
  $region1: #{tpu_custom_call.1} parent=0
    #allocation2 [shape = 'u8[65536]{0}', space=vmem, size = 0x10000, scoped, tag = 'input window, operand 0, single buffered']
    #allocation3 [shape = 's32[1]{0}', space=sflag, size = 0x4, scoped, tag = 'scoped memory for tpu_custom_call.1']
    #allocation4 [shape = 's32[1]{0}', space=sflag, size = 0x4, scoped, tag = 'scoped memory for tpu_custom_call.1']
    #allocation5 [shape = 'u8[24576]{0}', space=vmem, size = 0x6000, scoped, tag = 'input window, operand 1, single buffered']
    #allocation6 [shape = 's32[1]{0}', space=sflag, size = 0x4, scoped, tag = 'scoped memory for tpu_custom_call.1']
    #allocation7 [shape = 'u8[2048]{0}', space=vmem, size = 0x800, scoped, tag = 'output window, operand 0, single buffered']
    #allocation8 [shape = 'u8[2048]{0}', space=vmem, size = 0x800, scoped, tag = 'output window, operand 1, single buffered']
    #allocation9 [shape = 's32[1]{0}', space=sflag, size = 0x4, scoped, tag = 'scoped memory for tpu_custom_call.1']
    %9 = vsyncpa [#allocation3], 0
    %10 = vsyncpa [#allocation6], 0
    %11 = vsyncpa [#allocation4], 0
    %12 = vsyncpa [#allocation9], 0
    // Predicated region
    $region2: #{tpu_custom_call.1} parent=1 // pred_check
      _
    $region3: #{tpu_custom_call.1} parent=1 // pred_check_branch
      %14 = sbr.rel (0) target = $region5
    $region4: #{tpu_custom_call.1} parent=1 // pred_region
      %16 = vsyncadd [#allocation3], 0
      %s17 = sshll.u32 %s0, 4
      %s18 = int_to_ptr.hbm [resolvable:$true] %s17
      %s19 = sshll.u32 [#allocation2], 4
      %s20 = int_to_ptr.vmem [resolvable:$true] %s19
      %25 = dma.hbm_to_vmem [thread:$0]  %s18, 2048, %s20, [#allocation3], 512, 512, 32
    $region5: #{tpu_custom_call.1} parent=1 // pred_fallthru
      _
    // Predicated region
    $region6: #{tpu_custom_call.1} parent=1 // pred_check
      _
    $region7: #{tpu_custom_call.1} parent=1 // pred_check_branch
      %27 = sbr.rel (0) target = $region9
    $region8: #{tpu_custom_call.1} parent=1 // pred_region
      %29 = vsyncadd [#allocation6], 0
      %s30 = sshll.u32 %s1, 4
      %s31 = int_to_ptr.hbm [resolvable:$true] %s30
      %s32 = sshll.u32 [#allocation5], 4
      %s33 = int_to_ptr.vmem [resolvable:$true] %s32
      %38 = dma.hbm_to_vmem [thread:$0]  %s31, 768, %s33, [#allocation6], 256, 256, 16
    $region9: #{tpu_custom_call.1} parent=1 // pred_fallthru
      _
    // Predicated region
    $region10: #{tpu_custom_call.1} parent=1 // pred_check
      _
    $region11: #{tpu_custom_call.1} parent=1 // pred_check_branch
      %40 = sbr.rel (0) target = $region13
    $region12: #{tpu_custom_call.1} parent=1 // pred_region
      %42 = dma.done [#allocation3], 2048
    $region13: #{tpu_custom_call.1} parent=1 // pred_fallthru
      _
    // Predicated region
    $region14: #{tpu_custom_call.1} parent=1 // pred_check
      _
    $region15: #{tpu_custom_call.1} parent=1 // pred_check_branch
      %44 = sbr.rel (0) target = $region17
    $region16: #{tpu_custom_call.1} parent=1 // pred_region
      %46 = dma.done [#allocation6], 768
    $region17: #{tpu_custom_call.1} parent=1 // pred_fallthru
      _
    %v47 = vld [vmem:[#allocation2] sm:$0xff]
    %v48 = vld [vmem:[#allocation2 + $0x8] sm:$0xff]
    %v49 = vld [vmem:[#allocation2 + $0x10] sm:$0xff]
    %v50 = vld [vmem:[#allocation2 + $0x18] sm:$0xff]
    %v51 = vld [vmem:[#allocation2 + $0x20] sm:$0xff]
    %v52 = vld [vmem:[#allocation2 + $0x28] sm:$0xff]
    %v53 = vld [vmem:[#allocation2 + $0x30] sm:$0xff]
    %v54 = vld [vmem:[#allocation2 + $0x38] sm:$0xff]
    %v55 = vld [vmem:[#allocation2 + $0x40] sm:$0xff]
    %v56 = vld [vmem:[#allocation2 + $0x48] sm:$0xff]
    %v57 = vld [vmem:[#allocation2 + $0x50] sm:$0xff]
    %v58 = vld [vmem:[#allocation2 + $0x58] sm:$0xff]
    %v59 = vld [vmem:[#allocation2 + $0x60] sm:$0xff]
    %v60 = vld [vmem:[#allocation2 + $0x68] sm:$0xff]
    %v61 = vld [vmem:[#allocation2 + $0x70] sm:$0xff]
    %v62 = vld [vmem:[#allocation2 + $0x78] sm:$0xff]
    %v63 = vld [vmem:[#allocation5] ss:$4 sm:$0xf]
    %s64 = scalar_lea.vmem [#allocation5], 1
    %v65 = vld [vmem:[%s64] ss:$4 sm:$0xf]
    %s66 = scalar_lea.vmem [#allocation5], 2
    %v67 = vld [vmem:[%s66] ss:$4 sm:$0xf]
    %s68 = scalar_lea.vmem [#allocation5], 16
    %v69 = vld [vmem:[%s68] ss:$4 sm:$0xf]
    %s70 = scalar_lea.vmem %s68, 1 [#allocation5]
    %v71 = vld [vmem:[%s70] ss:$4 sm:$0xf]
    %s72 = scalar_lea.vmem %s68, 2 [#allocation5]
    %v73 = vld [vmem:[%s72] ss:$4 sm:$0xf]
    %s74 = scalar_lea.vmem [#allocation5], 32
    %v75 = vld [vmem:[%s74] ss:$4 sm:$0xf]
    %s76 = scalar_lea.vmem %s74, 1 [#allocation5]
    %v77 = vld [vmem:[%s76] ss:$4 sm:$0xf]
    %s78 = scalar_lea.vmem %s74, 2 [#allocation5]
    %v79 = vld [vmem:[%s78] ss:$4 sm:$0xf]
    %80 = vrot.lane.b32.xlu0 %v47, 32
    %v81 = vpop.permute.xlu0 %80
    %82 = vrot.lane.b32.xlu0 %v51, 32
    %v83 = vpop.permute.xlu0 %82
    %84 = vrot.lane.b32.xlu0 %v55, 32
    %v85 = vpop.permute.xlu0 %84
    %86 = vrot.lane.b32.xlu0 %v59, 32
    %v87 = vpop.permute.xlu0 %86
    %88 = vrot.lane.b32.xlu0 %v48, 32
    %v89 = vpop.permute.xlu0 %88
    %90 = vrot.lane.b32.xlu0 %v52, 32
    %v91 = vpop.permute.xlu0 %90
    %92 = vrot.lane.b32.xlu0 %v56, 32
    %v93 = vpop.permute.xlu0 %92
    %94 = vrot.lane.b32.xlu0 %v60, 32
    %v95 = vpop.permute.xlu0 %94
    %96 = vrot.lane.b32.xlu0 %v49, 32
    %v97 = vpop.permute.xlu0 %96
    %98 = vrot.lane.b32.xlu0 %v53, 32
    %v99 = vpop.permute.xlu0 %98
    %100 = vrot.lane.b32.xlu0 %v57, 32
    %v101 = vpop.permute.xlu0 %100
    %102 = vrot.lane.b32.xlu0 %v61, 32
    %v103 = vpop.permute.xlu0 %102
    %104 = vrot.lane.b32.xlu0 %v50, 32
    %v105 = vpop.permute.xlu0 %104
    %106 = vrot.lane.b32.xlu0 %v54, 32
    %v107 = vpop.permute.xlu0 %106
    %108 = vrot.lane.b32.xlu0 %v58, 32
    %v109 = vpop.permute.xlu0 %108
    %110 = vrot.lane.b32.xlu0 %v62, 32
    %v111 = vpop.permute.xlu0 %110
    %v112 = vlaneseq
    %v113 = vand.u32 %v112, 127
    %vm114 = vcmp.lt.s32.totalorder %v113, 32
    %v115 = vsel %vm114, %v97, %v105
    %v116 = vsel %vm114, %v99, %v107
    %v117 = vsel %vm114, %v101, %v109
    %v118 = vsel %vm114, %v103, %v111
    %v119 = vsel %vm114, %v89, %v97
    %v120 = vsel %vm114, %v91, %v99
    %v121 = vsel %vm114, %v93, %v101
    %v122 = vsel %vm114, %v95, %v103
    %v123 = vsel %vm114, %v81, %v89
    %v124 = vsel %vm114, %v83, %v91
    %v125 = vsel %vm114, %v85, %v93
    %v126 = vsel %vm114, %v87, %v95
    %v127 = vsel %vm114, %v105, %v81
    %v128 = vsel %vm114, %v107, %v83
    %v129 = vsel %vm114, %v109, %v85
    %v130 = vsel %vm114, %v111, %v87
    %131 = vrot.lane.b32.xlu0 %v47, 96
    %v132 = vpop.permute.xlu0 %131
    %133 = vrot.lane.b32.xlu0 %v51, 96
    %v134 = vpop.permute.xlu0 %133
    %135 = vrot.lane.b32.xlu0 %v55, 96
    %v136 = vpop.permute.xlu0 %135
    %137 = vrot.lane.b32.xlu0 %v59, 96
    %v138 = vpop.permute.xlu0 %137
    %139 = vrot.lane.b32.xlu0 %v48, 96
    %v140 = vpop.permute.xlu0 %139
    %141 = vrot.lane.b32.xlu0 %v52, 96
    %v142 = vpop.permute.xlu0 %141
    %143 = vrot.lane.b32.xlu0 %v56, 96
    %v144 = vpop.permute.xlu0 %143
    %145 = vrot.lane.b32.xlu0 %v60, 96
    %v146 = vpop.permute.xlu0 %145
    %147 = vrot.lane.b32.xlu0 %v49, 96
    %v148 = vpop.permute.xlu0 %147
    %149 = vrot.lane.b32.xlu0 %v53, 96
    %v150 = vpop.permute.xlu0 %149
    %151 = vrot.lane.b32.xlu0 %v57, 96
    %v152 = vpop.permute.xlu0 %151
    %153 = vrot.lane.b32.xlu0 %v61, 96
    %v154 = vpop.permute.xlu0 %153
    %155 = vrot.lane.b32.xlu0 %v50, 96
    %v156 = vpop.permute.xlu0 %155
    %157 = vrot.lane.b32.xlu0 %v54, 96
    %v158 = vpop.permute.xlu0 %157
    %159 = vrot.lane.b32.xlu0 %v58, 96
    %v160 = vpop.permute.xlu0 %159
    %161 = vrot.lane.b32.xlu0 %v62, 96
    %v162 = vpop.permute.xlu0 %161
    %vm163 = vcmp.lt.s32.totalorder %v113, 96
    %v164 = vsel %vm163, %v148, %v156
    %v165 = vsel %vm163, %v150, %v158
    %v166 = vsel %vm163, %v152, %v160
    %v167 = vsel %vm163, %v154, %v162
    %v168 = vsel %vm163, %v140, %v148
    %v169 = vsel %vm163, %v142, %v150
    %v170 = vsel %vm163, %v144, %v152
    %v171 = vsel %vm163, %v146, %v154
    %v172 = vsel %vm163, %v132, %v140
    %v173 = vsel %vm163, %v134, %v142
    %v174 = vsel %vm163, %v136, %v144
    %v175 = vsel %vm163, %v138, %v146
    %v176 = vsel %vm163, %v156, %v132
    %v177 = vsel %vm163, %v158, %v134
    %v178 = vsel %vm163, %v160, %v136
    %v179 = vsel %vm163, %v162, %v138
    %v180 = vlaneseq
    %v181 = vshrl.u32 %v180, 7
    %v182 = vadd.s32 %v181, 8
    %v183 = vadd.s32 %v181, 16
    %v184 = vadd.s32 %v181, 24
    %vm185 = vcmp.lt.s32.totalorder %v181, 0
    %v186 = vsub.s32 0, %v181
    %v187 = vsel %vm185, %v186, %v181
    %v188 = vshrl.u32 %v187, 4
    %v189 = vand.u32 %v187, 15
    %v190 = vsub.s32 0, %v189
    %v191 = vsel %vm185, %v190, %v189
    %vm192 = vcmp.lt.s32.totalorder %v182, 0
    %v193 = vsub.s32 0, %v182
    %v194 = vsel %vm192, %v193, %v182
    %v195 = vshrl.u32 %v194, 4
    %v196 = vand.u32 %v194, 15
    %v197 = vsub.s32 0, %v196
    %v198 = vsel %vm192, %v197, %v196
    %vm199 = vcmp.lt.s32.totalorder %v183, 0
    %v200 = vsub.s32 0, %v183
    %v201 = vsel %vm199, %v200, %v183
    %v202 = vshrl.u32 %v201, 4
    %v203 = vand.u32 %v201, 15
    %v204 = vsub.s32 0, %v203
    %v205 = vsel %vm199, %v204, %v203
    %vm206 = vcmp.lt.s32.totalorder %v184, 0
    %v207 = vsub.s32 0, %v184
    %v208 = vsel %vm206, %v207, %v184
    %v209 = vshrl.u32 %v208, 4
    %v210 = vand.u32 %v208, 15
    %v211 = vsub.s32 0, %v210
    %v212 = vsel %vm206, %v211, %v210
    %vm213 = vcmp.ne.s32.totalorder %v191, 0
    %vm214 = vcmp.ne.s32.totalorder %v198, 0
    %vm215 = vcmp.ne.s32.totalorder %v205, 0
    %vm216 = vcmp.ne.s32.totalorder %v212, 0
    %vm217 = vcmp.lt.s32.totalorder %v191, 0
    %vm218 = vcmp.lt.s32.totalorder %v198, 0
    %vm219 = vcmp.lt.s32.totalorder %v205, 0
    %vm220 = vcmp.lt.s32.totalorder %v212, 0
    %vm221 = vmand %vm217, %vm213
    %vm222 = vmand %vm218, %vm214
    %vm223 = vmand %vm219, %vm215
    %vm224 = vmand %vm220, %vm216
    %v225 = vadd.s32 %v191, 16
    %v226 = vadd.s32 %v198, 16
    %v227 = vadd.s32 %v205, 16
    %v228 = vadd.s32 %v212, 16
    %v229 = vsel %vm221, %v225, %v191
    %v230 = vsel %vm222, %v226, %v198
    %v231 = vsel %vm223, %v227, %v205
    %v232 = vsel %vm224, %v228, %v212
    %vm233 = vcmp.ge.s32.totalorder %v229, 1
    %vm234 = vcmp.ge.s32.totalorder %v230, 1
    %vm235 = vcmp.ge.s32.totalorder %v231, 1
    %vm236 = vcmp.ge.s32.totalorder %v232, 1
    %v237 = vsel %vm233, 1, 0
    %v238 = vsel %vm234, 1, 0
    %v239 = vsel %vm235, 1, 0
    %v240 = vsel %vm236, 1, 0
    %v241 = vcvt.s32.f32 %v237
    %v242 = vcvt.s32.f32 %v238
    %v243 = vcvt.s32.f32 %v239
    %v244 = vcvt.s32.f32 %v240
    %vm245 = vcmp.lt.s32.totalorder %v229, 15
    %vm246 = vcmp.lt.s32.totalorder %v230, 15
    %vm247 = vcmp.lt.s32.totalorder %v231, 15
    %vm248 = vcmp.lt.s32.totalorder %v232, 15
    %v249 = vsel %vm245, 1, 0
    %v250 = vsel %vm246, 1, 0
    %v251 = vsel %vm247, 1, 0
    %v252 = vsel %vm248, 1, 0
    %v253 = vcvt.s32.f32 %v249
    %v254 = vcvt.s32.f32 %v250
    %v255 = vcvt.s32.f32 %v251
    %v256 = vcvt.s32.f32 %v252
    %v258 = vperm.slane %v69, 0
    %v259 = vperm.slane %v69, 1
    %v260 = vperm.slane %v69, 2
    %v261 = vperm.slane %v69, 3
    %v266 = vmul.f32 %v127, %v258
    %v267 = vmul.f32 %v123, %v259
    %v268 = vmul.f32 %v119, %v260
    %v269 = vmul.f32 %v115, %v261
    %v270 = vmul.f32 %v128, %v258
    %v271 = vmul.f32 %v124, %v259
    %v272 = vmul.f32 %v120, %v260
    %v273 = vmul.f32 %v116, %v261
    %v274 = vmul.f32 %v129, %v258
    %v275 = vmul.f32 %v125, %v259
    %v276 = vmul.f32 %v121, %v260
    %v277 = vmul.f32 %v117, %v261
    %v278 = vmul.f32 %v130, %v258
    %v279 = vmul.f32 %v126, %v259
    %v280 = vmul.f32 %v122, %v260
    %v281 = vmul.f32 %v118, %v261
    %v283 = vperm.slane %v71, 0
    %v284 = vperm.slane %v71, 1
    %v285 = vperm.slane %v71, 2
    %v286 = vperm.slane %v71, 3
    %v291 = vmul.f32 %v47, %v283
    %v292 = vmul.f32 %v48, %v284
    %v293 = vmul.f32 %v49, %v285
    %v294 = vmul.f32 %v50, %v286
    %v295 = vmul.f32 %v51, %v283
    %v296 = vmul.f32 %v52, %v284
    %v297 = vmul.f32 %v53, %v285
    %v298 = vmul.f32 %v54, %v286
    %v299 = vmul.f32 %v55, %v283
    %v300 = vmul.f32 %v56, %v284
    %v301 = vmul.f32 %v57, %v285
    %v302 = vmul.f32 %v58, %v286
    %v303 = vmul.f32 %v59, %v283
    %v304 = vmul.f32 %v60, %v284
    %v305 = vmul.f32 %v61, %v285
    %v306 = vmul.f32 %v62, %v286
    %v307 = vadd.f32 %v266, %v291
    %v308 = vadd.f32 %v267, %v292
    %v309 = vadd.f32 %v268, %v293
    %v310 = vadd.f32 %v269, %v294
    %v311 = vadd.f32 %v270, %v295
    %v312 = vadd.f32 %v271, %v296
    %v313 = vadd.f32 %v272, %v297
    %v314 = vadd.f32 %v273, %v298
    %v315 = vadd.f32 %v274, %v299
    %v316 = vadd.f32 %v275, %v300
    %v317 = vadd.f32 %v276, %v301
    %v318 = vadd.f32 %v277, %v302
    %v319 = vadd.f32 %v278, %v303
    %v320 = vadd.f32 %v279, %v304
    %v321 = vadd.f32 %v280, %v305
    %v322 = vadd.f32 %v281, %v306
    %v324 = vperm.slane %v73, 0
    %v325 = vperm.slane %v73, 1
    %v326 = vperm.slane %v73, 2
    %v327 = vperm.slane %v73, 3
    %v332 = vmul.f32 %v172, %v324
    %v333 = vmul.f32 %v168, %v325
    %v334 = vmul.f32 %v164, %v326
    %v335 = vmul.f32 %v176, %v327
    %v336 = vmul.f32 %v173, %v324
    %v337 = vmul.f32 %v169, %v325
    %v338 = vmul.f32 %v165, %v326
    %v339 = vmul.f32 %v177, %v327
    %v340 = vmul.f32 %v174, %v324
    %v341 = vmul.f32 %v170, %v325
    %v342 = vmul.f32 %v166, %v326
    %v343 = vmul.f32 %v178, %v327
    %v344 = vmul.f32 %v175, %v324
    %v345 = vmul.f32 %v171, %v325
    %v346 = vmul.f32 %v167, %v326
    %v347 = vmul.f32 %v179, %v327
    %v348 = vadd.f32 %v307, %v332
    %v349 = vadd.f32 %v308, %v333
    %v350 = vadd.f32 %v309, %v334
    %v351 = vadd.f32 %v310, %v335
    %v352 = vadd.f32 %v311, %v336
    %v353 = vadd.f32 %v312, %v337
    %v354 = vadd.f32 %v313, %v338
    %v355 = vadd.f32 %v314, %v339
    %v356 = vadd.f32 %v315, %v340
    %v357 = vadd.f32 %v316, %v341
    %v358 = vadd.f32 %v317, %v342
    %v359 = vadd.f32 %v318, %v343
    %v360 = vadd.f32 %v319, %v344
    %v361 = vadd.f32 %v320, %v345
    %v362 = vadd.f32 %v321, %v346
    %v363 = vadd.f32 %v322, %v347
    %v365 = vperm.slane %v63, 0
    %v366 = vperm.slane %v63, 1
    %v367 = vperm.slane %v63, 2
    %v368 = vperm.slane %v63, 3
    %v373 = vmul.f32 %v127, %v365
    %v374 = vmul.f32 %v123, %v366
    %v375 = vmul.f32 %v119, %v367
    %v376 = vmul.f32 %v115, %v368
    %v377 = vmul.f32 %v128, %v365
    %v378 = vmul.f32 %v124, %v366
    %v379 = vmul.f32 %v120, %v367
    %v380 = vmul.f32 %v116, %v368
    %v381 = vmul.f32 %v129, %v365
    %v382 = vmul.f32 %v125, %v366
    %v383 = vmul.f32 %v121, %v367
    %v384 = vmul.f32 %v117, %v368
    %v385 = vmul.f32 %v130, %v365
    %v386 = vmul.f32 %v126, %v366
    %v387 = vmul.f32 %v122, %v367
    %v388 = vmul.f32 %v118, %v368
    %v390 = vperm.slane %v65, 0
    %v391 = vperm.slane %v65, 1
    %v392 = vperm.slane %v65, 2
    %v393 = vperm.slane %v65, 3
    %v398 = vmul.f32 %v47, %v390
    %v399 = vmul.f32 %v48, %v391
    %v400 = vmul.f32 %v49, %v392
    %v401 = vmul.f32 %v50, %v393
    %v402 = vmul.f32 %v51, %v390
    %v403 = vmul.f32 %v52, %v391
    %v404 = vmul.f32 %v53, %v392
    %v405 = vmul.f32 %v54, %v393
    %v406 = vmul.f32 %v55, %v390
    %v407 = vmul.f32 %v56, %v391
    %v408 = vmul.f32 %v57, %v392
    %v409 = vmul.f32 %v58, %v393
    %v410 = vmul.f32 %v59, %v390
    %v411 = vmul.f32 %v60, %v391
    %v412 = vmul.f32 %v61, %v392
    %v413 = vmul.f32 %v62, %v393
    %v414 = vadd.f32 %v373, %v398
    %v415 = vadd.f32 %v374, %v399
    %v416 = vadd.f32 %v375, %v400
    %v417 = vadd.f32 %v376, %v401
    %v418 = vadd.f32 %v377, %v402
    %v419 = vadd.f32 %v378, %v403
    %v420 = vadd.f32 %v379, %v404
    %v421 = vadd.f32 %v380, %v405
    %v422 = vadd.f32 %v381, %v406
    %v423 = vadd.f32 %v382, %v407
    %v424 = vadd.f32 %v383, %v408
    %v425 = vadd.f32 %v384, %v409
    %v426 = vadd.f32 %v385, %v410
    %v427 = vadd.f32 %v386, %v411
    %v428 = vadd.f32 %v387, %v412
    %v429 = vadd.f32 %v388, %v413
    %v431 = vperm.slane %v67, 0
    %v432 = vperm.slane %v67, 1
    %v433 = vperm.slane %v67, 2
    %v434 = vperm.slane %v67, 3
    %v439 = vmul.f32 %v172, %v431
    %v440 = vmul.f32 %v168, %v432
    %v441 = vmul.f32 %v164, %v433
    %v442 = vmul.f32 %v176, %v434
    %v443 = vmul.f32 %v173, %v431
    %v444 = vmul.f32 %v169, %v432
    %v445 = vmul.f32 %v165, %v433
    %v446 = vmul.f32 %v177, %v434
    %v447 = vmul.f32 %v174, %v431
    %v448 = vmul.f32 %v170, %v432
    %v449 = vmul.f32 %v166, %v433
    %v450 = vmul.f32 %v178, %v434
    %v451 = vmul.f32 %v175, %v431
    %v452 = vmul.f32 %v171, %v432
    %v453 = vmul.f32 %v167, %v433
    %v454 = vmul.f32 %v179, %v434
    %v455 = vadd.f32 %v414, %v439
    %v456 = vadd.f32 %v415, %v440
    %v457 = vadd.f32 %v416, %v441
    %v458 = vadd.f32 %v417, %v442
    %v459 = vadd.f32 %v418, %v443
    %v460 = vadd.f32 %v419, %v444
    %v461 = vadd.f32 %v420, %v445
    %v462 = vadd.f32 %v421, %v446
    %v463 = vadd.f32 %v422, %v447
    %v464 = vadd.f32 %v423, %v448
    %v465 = vadd.f32 %v424, %v449
    %v466 = vadd.f32 %v425, %v450
    %v467 = vadd.f32 %v426, %v451
    %v468 = vadd.f32 %v427, %v452
    %v469 = vadd.f32 %v428, %v453
    %v470 = vadd.f32 %v429, %v454
    %v471 = vrot.slane %v455, 7
    %v472 = vrot.slane %v456, 7
    %v473 = vrot.slane %v457, 7
    %v474 = vrot.slane %v458, 7
    %v475 = vrot.slane %v459, 7
    %v476 = vrot.slane %v460, 7
    %v477 = vrot.slane %v461, 7
    %v478 = vrot.slane %v462, 7
    %v479 = vrot.slane %v463, 7
    %v480 = vrot.slane %v464, 7
    %v481 = vrot.slane %v465, 7
    %v482 = vrot.slane %v466, 7
    %v483 = vrot.slane %v467, 7
    %v484 = vrot.slane %v468, 7
    %v485 = vrot.slane %v469, 7
    %v486 = vrot.slane %v470, 7
    %vm487 = vcmp.lt.s32.totalorder %v181, 1
    %v488 = vsel %vm487, %v479, %v483
    %v489 = vsel %vm487, %v480, %v484
    %v490 = vsel %vm487, %v481, %v485
    %v491 = vsel %vm487, %v482, %v486
    %v492 = vsel %vm487, %v475, %v479
    %v493 = vsel %vm487, %v476, %v480
    %v494 = vsel %vm487, %v477, %v481
    %v495 = vsel %vm487, %v478, %v482
    %v496 = vsel %vm487, %v471, %v475
    %v497 = vsel %vm487, %v472, %v476
    %v498 = vsel %vm487, %v473, %v477
    %v499 = vsel %vm487, %v474, %v478
    %v500 = vsel %vm487, %v483, %v471
    %v501 = vsel %vm487, %v484, %v472
    %v502 = vsel %vm487, %v485, %v473
    %v503 = vsel %vm487, %v486, %v474
    %v504 = vmul.f32 %v241, %v500
    %v505 = vmul.f32 %v241, %v501
    %v506 = vmul.f32 %v241, %v502
    %v507 = vmul.f32 %v241, %v503
    %v508 = vmul.f32 %v242, %v496
    %v509 = vmul.f32 %v242, %v497
    %v510 = vmul.f32 %v242, %v498
    %v511 = vmul.f32 %v242, %v499
    %v512 = vmul.f32 %v243, %v492
    %v513 = vmul.f32 %v243, %v493
    %v514 = vmul.f32 %v243, %v494
    %v515 = vmul.f32 %v243, %v495
    %v516 = vmul.f32 %v244, %v488
    %v517 = vmul.f32 %v244, %v489
    %v518 = vmul.f32 %v244, %v490
    %v519 = vmul.f32 %v244, %v491
    %v520 = vadd.f32 %v348, %v504
    %v521 = vadd.f32 %v349, %v505
    %v522 = vadd.f32 %v350, %v506
    %v523 = vadd.f32 %v351, %v507
    %v524 = vadd.f32 %v352, %v508
    %v525 = vadd.f32 %v353, %v509
    %v526 = vadd.f32 %v354, %v510
    %v527 = vadd.f32 %v355, %v511
    %v528 = vadd.f32 %v356, %v512
    %v529 = vadd.f32 %v357, %v513
    %v530 = vadd.f32 %v358, %v514
    %v531 = vadd.f32 %v359, %v515
    %v532 = vadd.f32 %v360, %v516
    %v533 = vadd.f32 %v361, %v517
    %v534 = vadd.f32 %v362, %v518
    %v535 = vadd.f32 %v363, %v519
    %v537 = vperm.slane %v75, 0
    %v538 = vperm.slane %v75, 1
    %v539 = vperm.slane %v75, 2
    %v540 = vperm.slane %v75, 3
    %v545 = vmul.f32 %v127, %v537
    %v546 = vmul.f32 %v123, %v538
    %v547 = vmul.f32 %v119, %v539
    %v548 = vmul.f32 %v115, %v540
    %v549 = vmul.f32 %v128, %v537
    %v550 = vmul.f32 %v124, %v538
    %v551 = vmul.f32 %v120, %v539
    %v552 = vmul.f32 %v116, %v540
    %v553 = vmul.f32 %v129, %v537
    %v554 = vmul.f32 %v125, %v538
    %v555 = vmul.f32 %v121, %v539
    %v556 = vmul.f32 %v117, %v540
    %v557 = vmul.f32 %v130, %v537
    %v558 = vmul.f32 %v126, %v538
    %v559 = vmul.f32 %v122, %v539
    %v560 = vmul.f32 %v118, %v540
    %v562 = vperm.slane %v77, 0
    %v563 = vperm.slane %v77, 1
    %v564 = vperm.slane %v77, 2
    %v565 = vperm.slane %v77, 3
    %v570 = vmul.f32 %v47, %v562
    %v571 = vmul.f32 %v48, %v563
    %v572 = vmul.f32 %v49, %v564
    %v573 = vmul.f32 %v50, %v565
    %v574 = vmul.f32 %v51, %v562
    %v575 = vmul.f32 %v52, %v563
    %v576 = vmul.f32 %v53, %v564
    %v577 = vmul.f32 %v54, %v565
    %v578 = vmul.f32 %v55, %v562
    %v579 = vmul.f32 %v56, %v563
    %v580 = vmul.f32 %v57, %v564
    %v581 = vmul.f32 %v58, %v565
    %v582 = vmul.f32 %v59, %v562
    %v583 = vmul.f32 %v60, %v563
    %v584 = vmul.f32 %v61, %v564
    %v585 = vmul.f32 %v62, %v565
    %v586 = vadd.f32 %v545, %v570
    %v587 = vadd.f32 %v546, %v571
    %v588 = vadd.f32 %v547, %v572
    %v589 = vadd.f32 %v548, %v573
    %v590 = vadd.f32 %v549, %v574
    %v591 = vadd.f32 %v550, %v575
    %v592 = vadd.f32 %v551, %v576
    %v593 = vadd.f32 %v552, %v577
    %v594 = vadd.f32 %v553, %v578
    %v595 = vadd.f32 %v554, %v579
    %v596 = vadd.f32 %v555, %v580
    %v597 = vadd.f32 %v556, %v581
    %v598 = vadd.f32 %v557, %v582
    %v599 = vadd.f32 %v558, %v583
    %v600 = vadd.f32 %v559, %v584
    %v601 = vadd.f32 %v560, %v585
    %v603 = vperm.slane %v79, 0
    %v604 = vperm.slane %v79, 1
    %v605 = vperm.slane %v79, 2
    %v606 = vperm.slane %v79, 3
    %v611 = vmul.f32 %v172, %v603
    %v612 = vmul.f32 %v168, %v604
    %v613 = vmul.f32 %v164, %v605
    %v614 = vmul.f32 %v176, %v606
    %v615 = vmul.f32 %v173, %v603
    %v616 = vmul.f32 %v169, %v604
    %v617 = vmul.f32 %v165, %v605
    %v618 = vmul.f32 %v177, %v606
    %v619 = vmul.f32 %v174, %v603
    %v620 = vmul.f32 %v170, %v604
    %v621 = vmul.f32 %v166, %v605
    %v622 = vmul.f32 %v178, %v606
    %v623 = vmul.f32 %v175, %v603
    %v624 = vmul.f32 %v171, %v604
    %v625 = vmul.f32 %v167, %v605
    %v626 = vmul.f32 %v179, %v606
    %v627 = vadd.f32 %v586, %v611
    %v628 = vadd.f32 %v587, %v612
    %v629 = vadd.f32 %v588, %v613
    %v630 = vadd.f32 %v589, %v614
    %v631 = vadd.f32 %v590, %v615
    %v632 = vadd.f32 %v591, %v616
    %v633 = vadd.f32 %v592, %v617
    %v634 = vadd.f32 %v593, %v618
    %v635 = vadd.f32 %v594, %v619
    %v636 = vadd.f32 %v595, %v620
    %v637 = vadd.f32 %v596, %v621
    %v638 = vadd.f32 %v597, %v622
    %v639 = vadd.f32 %v598, %v623
    %v640 = vadd.f32 %v599, %v624
    %v641 = vadd.f32 %v600, %v625
    %v642 = vadd.f32 %v601, %v626
    %v643 = vrot.slane %v627, 1
    %v644 = vrot.slane %v628, 1
    %v645 = vrot.slane %v629, 1
    %v646 = vrot.slane %v630, 1
    %v647 = vrot.slane %v631, 1
    %v648 = vrot.slane %v632, 1
    %v649 = vrot.slane %v633, 1
    %v650 = vrot.slane %v634, 1
    %v651 = vrot.slane %v635, 1
    %v652 = vrot.slane %v636, 1
    %v653 = vrot.slane %v637, 1
    %v654 = vrot.slane %v638, 1
    %v655 = vrot.slane %v639, 1
    %v656 = vrot.slane %v640, 1
    %v657 = vrot.slane %v641, 1
    %v658 = vrot.slane %v642, 1
    %vm659 = vcmp.lt.s32.totalorder %v181, 7
    %v660 = vsel %vm659, %v651, %v655
    %v661 = vsel %vm659, %v652, %v656
    %v662 = vsel %vm659, %v653, %v657
    %v663 = vsel %vm659, %v654, %v658
    %v664 = vsel %vm659, %v647, %v651
    %v665 = vsel %vm659, %v648, %v652
    %v666 = vsel %vm659, %v649, %v653
    %v667 = vsel %vm659, %v650, %v654
    %v668 = vsel %vm659, %v643, %v647
    %v669 = vsel %vm659, %v644, %v648
    %v670 = vsel %vm659, %v645, %v649
    %v671 = vsel %vm659, %v646, %v650
    %v672 = vsel %vm659, %v655, %v643
    %v673 = vsel %vm659, %v656, %v644
    %v674 = vsel %vm659, %v657, %v645
    %v675 = vsel %vm659, %v658, %v646
    %v676 = vmul.f32 %v253, %v668
    %v677 = vmul.f32 %v253, %v669
    %v678 = vmul.f32 %v253, %v670
    %v679 = vmul.f32 %v253, %v671
    %v680 = vmul.f32 %v254, %v664
    %v681 = vmul.f32 %v254, %v665
    %v682 = vmul.f32 %v254, %v666
    %v683 = vmul.f32 %v254, %v667
    %v684 = vmul.f32 %v255, %v660
    %v685 = vmul.f32 %v255, %v661
    %v686 = vmul.f32 %v255, %v662
    %v687 = vmul.f32 %v255, %v663
    %v688 = vmul.f32 %v256, %v672
    %v689 = vmul.f32 %v256, %v673
    %v690 = vmul.f32 %v256, %v674
    %v691 = vmul.f32 %v256, %v675
    %v692 = vadd.f32 %v520, %v676
    %v693 = vadd.f32 %v521, %v677
    %v694 = vadd.f32 %v522, %v678
    %v695 = vadd.f32 %v523, %v679
    %v696 = vadd.f32 %v524, %v680
    %v697 = vadd.f32 %v525, %v681
    %v698 = vadd.f32 %v526, %v682
    %v699 = vadd.f32 %v527, %v683
    %v700 = vadd.f32 %v528, %v684
    %v701 = vadd.f32 %v529, %v685
    %v702 = vadd.f32 %v530, %v686
    %v703 = vadd.f32 %v531, %v687
    %v704 = vadd.f32 %v532, %v688
    %v705 = vadd.f32 %v533, %v689
    %v706 = vadd.f32 %v534, %v690
    %v707 = vadd.f32 %v535, %v691
    %v708 = vadd.f32 %v692, %v696
    %v709 = vadd.f32 %v708, %v700
    %v710 = vadd.f32 %v709, %v704
    %v711 = vrot.slane %v710, 4
    %v712 = vadd.f32 %v710, %v711
    %v713 = vrot.slane %v712, 2
    %v714 = vadd.f32 %v712, %v713
    %v715 = vrot.slane %v714, 1
    %v716 = vadd.f32 %v714, %v715
    %v717 = vadd.f32 %v693, %v697
    %v718 = vadd.f32 %v717, %v701
    %v719 = vadd.f32 %v718, %v705
    %v720 = vrot.slane %v719, 4
    %v721 = vadd.f32 %v719, %v720
    %v722 = vrot.slane %v721, 2
    %v723 = vadd.f32 %v721, %v722
    %v724 = vrot.slane %v723, 1
    %v725 = vadd.f32 %v723, %v724
    %v726 = vadd.f32 %v694, %v698
    %v727 = vadd.f32 %v726, %v702
    %v728 = vadd.f32 %v727, %v706
    %v729 = vrot.slane %v728, 4
    %v730 = vadd.f32 %v728, %v729
    %v731 = vrot.slane %v730, 2
    %v732 = vadd.f32 %v730, %v731
    %v733 = vrot.slane %v732, 1
    %v734 = vadd.f32 %v732, %v733
    %v735 = vadd.f32 %v695, %v699
    %v736 = vadd.f32 %v735, %v703
    %v737 = vadd.f32 %v736, %v707
    %v738 = vrot.slane %v737, 4
    %v739 = vadd.f32 %v737, %v738
    %v740 = vrot.slane %v739, 2
    %v741 = vadd.f32 %v739, %v740
    %v742 = vrot.slane %v741, 1
    %v743 = vadd.f32 %v741, %v742
    %v748 = vrot.slane %v725, 7
    %v749 = vrot.slane %v734, 6
    %v750 = vrot.slane %v743, 5
    %vm751 = vcmask 1040384
    %v752 = vsel %vm751, %v716, %v748
    %vm753 = vcmask 1042434
    %v754 = vsel %vm753, %v749, %v750
    %vm755 = vcmask 1041408
    %v756 = vsel %vm755, %v752, %v754
    %v758 = vlaneseq
    %vm759 = vcmp.ge.s32.totalorder %v758, 0
    %vm760 = vcmp.lt.s32.totalorder %v758, 512
    %vm761 = vmand %vm759, %vm760
    %762 = vst.msk [vmem:[#allocation7] sm:$0xf] %vm761, %v756
    %v763 = vmul.f32 %v692, %v692
    %v764 = vmul.f32 %v693, %v693
    %v765 = vmul.f32 %v694, %v694
    %v766 = vmul.f32 %v695, %v695
    %v767 = vmul.f32 %v696, %v696
    %v768 = vmul.f32 %v697, %v697
    %v769 = vmul.f32 %v698, %v698
    %v770 = vmul.f32 %v699, %v699
    %v771 = vmul.f32 %v700, %v700
    %v772 = vmul.f32 %v701, %v701
    %v773 = vmul.f32 %v702, %v702
    %v774 = vmul.f32 %v703, %v703
    %v775 = vmul.f32 %v704, %v704
    %v776 = vmul.f32 %v705, %v705
    %v777 = vmul.f32 %v706, %v706
    %v778 = vmul.f32 %v707, %v707
    %v779 = vadd.f32 %v763, %v767
    %v780 = vadd.f32 %v779, %v771
    %v781 = vadd.f32 %v780, %v775
    %v782 = vrot.slane %v781, 4
    %v783 = vadd.f32 %v781, %v782
    %v784 = vrot.slane %v783, 2
    %v785 = vadd.f32 %v783, %v784
    %v786 = vrot.slane %v785, 1
    %v787 = vadd.f32 %v785, %v786
    %v788 = vadd.f32 %v764, %v768
    %v789 = vadd.f32 %v788, %v772
    %v790 = vadd.f32 %v789, %v776
    %v791 = vrot.slane %v790, 4
    %v792 = vadd.f32 %v790, %v791
    %v793 = vrot.slane %v792, 2
    %v794 = vadd.f32 %v792, %v793
    %v795 = vrot.slane %v794, 1
    %v796 = vadd.f32 %v794, %v795
    %v797 = vadd.f32 %v765, %v769
    %v798 = vadd.f32 %v797, %v773
    %v799 = vadd.f32 %v798, %v777
    %v800 = vrot.slane %v799, 4
    %v801 = vadd.f32 %v799, %v800
    %v802 = vrot.slane %v801, 2
    %v803 = vadd.f32 %v801, %v802
    %v804 = vrot.slane %v803, 1
    %v805 = vadd.f32 %v803, %v804
    %v806 = vadd.f32 %v766, %v770
    %v807 = vadd.f32 %v806, %v774
    %v808 = vadd.f32 %v807, %v778
    %v809 = vrot.slane %v808, 4
    %v810 = vadd.f32 %v808, %v809
    %v811 = vrot.slane %v810, 2
    %v812 = vadd.f32 %v810, %v811
    %v813 = vrot.slane %v812, 1
    %v814 = vadd.f32 %v812, %v813
    %v819 = vrot.slane %v796, 7
    %v820 = vrot.slane %v805, 6
    %v821 = vrot.slane %v814, 5
    %v822 = vsel %vm751, %v787, %v819
    %v823 = vsel %vm753, %v820, %v821
    %v824 = vsel %vm755, %v822, %v823
    %826 = vst.msk [vmem:[#allocation8] sm:$0xf] %vm761, %v824
    // Predicated region
    $region18: #{tpu_custom_call.1} parent=1 // pred_check
      _
    $region19: #{tpu_custom_call.1} parent=1 // pred_check_branch
      %828 = sbr.rel (0) target = $region21
    $region20: #{tpu_custom_call.1} parent=1 // pred_region
      %830 = vsyncadd [#allocation4], 0
      %s832 = sshll.u32 [#allocation7], 4
      %s833 = int_to_ptr.vmem [resolvable:$true] %s832
      %s834 = sshll.u32 %s2, 4
      %s835 = int_to_ptr.hbm [resolvable:$true] %s834
      %837 = dma.vmem_to_hbm [thread:$0]  %s833, 64, %s835, [#allocation4]
    $region21: #{tpu_custom_call.1} parent=1 // pred_fallthru
      _
    // Predicated region
    $region22: #{tpu_custom_call.1} parent=1 // pred_check
      _
    $region23: #{tpu_custom_call.1} parent=1 // pred_check_branch
      %839 = sbr.rel (0) target = $region25
    $region24: #{tpu_custom_call.1} parent=1 // pred_region
      %841 = vsyncadd [#allocation9], 0
      %s843 = sshll.u32 [#allocation8], 4
      %s844 = int_to_ptr.vmem [resolvable:$true] %s843
      %s845 = sshll.u32 %s3, 4
      %s846 = int_to_ptr.hbm [resolvable:$true] %s845
      %848 = dma.vmem_to_hbm [thread:$0]  %s844, 64, %s846, [#allocation9]
    $region25: #{tpu_custom_call.1} parent=1 // pred_fallthru
      _
    // Predicated region
    $region26: #{tpu_custom_call.1} parent=1 // pred_check
      _
    $region27: #{tpu_custom_call.1} parent=1 // pred_check_branch
      %850 = sbr.rel (0) target = $region29
    $region28: #{tpu_custom_call.1} parent=1 // pred_region
      %852 = dma.done [#allocation4], 64
    $region29: #{tpu_custom_call.1} parent=1 // pred_fallthru
      _
    // Predicated region
    $region30: #{tpu_custom_call.1} parent=1 // pred_check
      _
    $region31: #{tpu_custom_call.1} parent=1 // pred_check_branch
      %854 = sbr.rel (0) target = $region33
    $region32: #{tpu_custom_call.1} parent=1 // pred_region
      %856 = dma.done [#allocation9], 64
    $region33: #{tpu_custom_call.1} parent=1 // pred_fallthru
      _
    %857 = vsyncpa [#allocation3], 1
    %858 = vsyncpa [#allocation6], 1
    %859 = vsyncpa [#allocation4], 1
    %860 = vsyncpa [#allocation9], 1

</llo_original>
